<compile_context>
chip_gen: v6e
topology: v6e:2x2x1
jax: 0.10.0
libtpu: 0.0.40
codegen_flags: <defaults>
</compile_context>

<pallas_src>
import functools

import jax
import jax.numpy as jnp
from jax.experimental import pallas as pl
from jax.experimental.pallas import tpu as pltpu


def _label_smoothing_kernel(preds_ref, tgt_ref, out_ref, *, smoothing, num_classes):
    x = preds_ref[...]                                           # (TB, C), input dtype

    # Row max on the raw dtype (max is exact), then a single f32 pass for z.
    m = jnp.max(x, axis=-1, keepdims=True).astype(jnp.float32)   # (TB, 1)
    z = x.astype(jnp.float32) - m                                # (TB, C) f32, z <= 0

    # Three fused row reductions over z.
    lse = jnp.log(jnp.sum(jnp.exp(z), axis=-1, keepdims=True))   # (TB, 1)
    sum_z = jnp.sum(z, axis=-1, keepdims=True)                   # (TB, 1)

    tgt = tgt_ref[...]                                           # (TB, 1) int32
    cls = jax.lax.broadcasted_iota(jnp.int32, z.shape, 1)
    z_tgt = jnp.sum(jnp.where(cls == tgt, z, jnp.float32(0.0)),
                    axis=-1, keepdims=True)                      # (TB, 1)

    # per-row loss = lse - (s/C)*sum(z) - (1-s)*z[target]
    #   == s/C * sum_c(-log p_c) + (1-s) * (-log p_target)
    row_loss = (lse
                - jnp.float32(smoothing / num_classes) * sum_z
                - jnp.float32(1.0 - smoothing) * z_tgt)          # (TB, 1)
    tile_loss = jnp.sum(row_loss)

    # Each tile owns its own (1, 8, 128) output block (lane-dense, unmasked
    # store) -> grid axis can be 'parallel'; wrapper reads one element per tile.
    out_ref[...] = jnp.broadcast_to(tile_loss, out_ref.shape)


def _vmem_capacity_bytes():
    try:
        return int(pltpu.get_tpu_info().vmem_capacity_bytes)
    except Exception:
        return 64 * 1024 * 1024  # conservative fallback (v7x per-TC VMEM)


def _lane_pad(n):
    return ((n + 127) // 128) * 128


def _pick_tile_b(batch, num_classes, itemsize, *, max_tile=1024):
    """Largest sublane-aligned divisor of `batch` such that the double-buffered
    preds block plus its f32 in-kernel working set stays within ~70% of this
    generation's VMEM, while keeping >= 2 grid steps (v7x megacore) when the
    batch allows it."""
    sub = {4: 8, 2: 16, 1: 32}.get(itemsize, 8)       # packed sublane granularity
    lanes = _lane_pad(num_classes)
    budget = int(0.7 * _vmem_capacity_bytes())
    # double-buffered input block + ~2 full-width f32 temporaries per row
    per_row_bytes = 2 * lanes * itemsize + 2 * lanes * 4
    cap = min(max(sub, budget // per_row_bytes), max_tile, batch)
    if batch >= 2 * sub:
        cap = min(cap, batch // 2)                    # guarantee >= 2 grid steps
    cap -= cap % sub
    for t in range(cap, 0, -sub):
        if batch % t == 0:
            return t
    cap8 = min(cap, batch)
    cap8 -= cap8 % 8
    for t in range(cap8, 0, -8):
        if batch % t == 0:
            return t
    return batch  # ragged small batch: one full-batch tile (block == array dim)


def label_smoothing_loss(preds, target, *, smoothing=0.1, tile_b=None):
    """preds: [B, C] float; target: [B] int. Scalar f32 loss
    (reduction='mean', weight=None), matching LabelSmoothingLoss.forward."""
    assert 0.0 <= smoothing < 1.0
    B, C = preds.shape
    if tile_b is None:
        tile_b = _pick_tile_b(B, C, preds.dtype.itemsize)
    assert B % tile_b == 0, "batch must be a multiple of tile_b"
    num_tiles = B // tile_b
    target2d = target.astype(jnp.int32).reshape(B, 1)

    # vmem_limit derived from the actual chosen tile (double-buffered input,
    # f32 working set, target + output blocks, small slack); clamped to ~90%
    # of this generation's physical VMEM.
    lanes = _lane_pad(C)
    blk = tile_b * lanes * preds.dtype.itemsize
    f32blk = tile_b * lanes * 4
    tgtblk = tile_b * 128 * 4
    outblk = 8 * 128 * 4
    needed = 2 * (blk + f32blk + tgtblk + outblk) + (2 << 20)
    vmem_limit = int(min(max(needed, 32 << 20), 0.9 * _vmem_capacity_bytes()))

    kernel = functools.partial(
        _label_smoothing_kernel, smoothing=float(smoothing), num_classes=C)

    partials = pl.pallas_call(
        kernel,
        out_shape=jax.ShapeDtypeStruct((num_tiles, 8, 128), jnp.float32),
        grid_spec=pltpu.PrefetchScalarGridSpec(
            num_scalar_prefetch=0,
            grid=(num_tiles,),
            in_specs=[
                pl.BlockSpec((tile_b, C), lambda i: (i, 0)),
                pl.BlockSpec((tile_b, 1), lambda i: (i, 0)),
            ],
            out_specs=pl.BlockSpec((1, 8, 128), lambda i: (i, 0, 0)),
        ),
        compiler_params=pltpu.CompilerParams(
            dimension_semantics=("parallel",),
            vmem_limit_bytes=vmem_limit),
    )(preds, target2d)

    # reduction='mean': every element of a tile's block holds that tile's
    # partial sum; take one per tile, sum, and divide by the batch size.
    return jnp.sum(partials[:, 0, 0]) / jnp.float32(B)


def _reference(preds, target, smoothing=0.1):
    logp = jax.nn.log_softmax(preds.astype(jnp.float32), axis=-1)
    n = preds.shape[-1]
    loss = jnp.mean(-jnp.sum(logp, axis=-1))
    nll = jnp.mean(-jnp.take_along_axis(logp, target[:, None], axis=-1)[:, 0])
    return smoothing * (loss / n) + (1.0 - smoothing) * nll


if __name__ == "__main__":
    key = jax.random.PRNGKey(0)
    k1, k2, k3, k4 = jax.random.split(key, 4)

    # Small demo shape (auto tile_b -> 2 grid steps, exercises megacore path).
    B, C = 16, 32
    preds = jax.random.normal(k1, (B, C), dtype=jnp.float32)
    target = jax.random.randint(k2, (B,), 0, C, dtype=jnp.int32)
    out = jax.block_until_ready(label_smoothing_loss(preds, target, smoothing=0.1))
    ref = _reference(preds, target, smoothing=0.1)
    assert jnp.allclose(out, ref, rtol=1e-5, atol=1e-5), (out, ref)

    # Multi-tile path with explicit tile_b (4-step parallel grid).
    B2, C2 = 64, 256
    preds2 = jax.random.normal(k3, (B2, C2), dtype=jnp.float32)
    target2 = jax.random.randint(k4, (B2,), 0, C2, dtype=jnp.int32)
    out2 = jax.block_until_ready(
        label_smoothing_loss(preds2, target2, smoothing=0.1, tile_b=16))
    ref2 = _reference(preds2, target2, smoothing=0.1)
    assert jnp.allclose(out2, ref2, rtol=1e-5, atol=1e-5), (out2, ref2)

    print("KERNEL_OK")
</pallas_src>

<mosaic_0001>
module attributes {stable_mosaic.version = 11 : i64} {
  func.func @_label_smoothing_kernel(%arg0: i32, %arg1: memref<8x32xf32, #tpu.memory_space<vmem>>, %arg2: memref<8x1xi32, #tpu.memory_space<vmem>>, %arg3: memref<1x8x128xf32, #tpu.memory_space<vmem>>) attributes {dimension_semantics = [#tpu.dimension_semantics<parallel>], iteration_bounds = array<i64: 2>, scalar_prefetch = 0 : i64, scratch_operands = 0 : i64, tpu.core_type = #tpu.core_type<tc>, window_params = [{transform_indices = @transform_0, window_bounds = array<i64: 8, 32>}, {transform_indices = @transform_1, window_bounds = array<i64: 8, 1>}, {transform_indices = @transform_2, window_bounds = array<i64: 1, 8, 128>}]} {
    %c0 = arith.constant 0 : index
    %c0_0 = arith.constant 0 : index
    %0 = vector.load %arg1[%c0, %c0_0] : memref<8x32xf32, #tpu.memory_space<vmem>>, vector<8x32xf32>
    %cst = arith.constant dense<0xFF800000> : vector<8xf32>
    %1 = vector.multi_reduction <maximumf>, %0, %cst [1] : vector<8x32xf32> to vector<8xf32>
    %2 = vector.shape_cast %1 : vector<8xf32> to vector<8x1xf32>
    %3 = vector.broadcast %2 : vector<8x1xf32> to vector<8x32xf32>
    %4 = arith.subf %0, %3 : vector<8x32xf32>
    %5 = math.exp %4 : vector<8x32xf32>
    %cst_1 = arith.constant dense<0.000000e+00> : vector<8xf32>
    %6 = vector.multi_reduction <add>, %5, %cst_1 [1] : vector<8x32xf32> to vector<8xf32>
    %7 = vector.shape_cast %6 : vector<8xf32> to vector<8x1xf32>
    %8 = math.log %7 : vector<8x1xf32>
    %cst_2 = arith.constant dense<0.000000e+00> : vector<8xf32>
    %9 = vector.multi_reduction <add>, %4, %cst_2 [1] : vector<8x32xf32> to vector<8xf32>
    %10 = vector.shape_cast %9 : vector<8xf32> to vector<8x1xf32>
    %c0_3 = arith.constant 0 : index
    %c0_4 = arith.constant 0 : index
    %11 = vector.load %arg2[%c0_3, %c0_4] : memref<8x1xi32, #tpu.memory_space<vmem>>, vector<8x1xi32>
    %12 = tpu.iota {dimensions = array<i32: 1>} : vector<8x32xi32>
    %13 = vector.broadcast %11 : vector<8x1xi32> to vector<8x32xi32>
    %14 = arith.cmpi eq, %12, %13 : vector<8x32xi32>
    %cst_5 = arith.constant 0.000000e+00 : f32
    %15 = vector.broadcast %cst_5 : f32 to vector<8x32xf32>
    %16 = arith.select %14, %4, %15 : vector<8x32xi1>, vector<8x32xf32>
    %cst_6 = arith.constant dense<0.000000e+00> : vector<8xf32>
    %17 = vector.multi_reduction <add>, %16, %cst_6 [1] : vector<8x32xf32> to vector<8xf32>
    %18 = vector.shape_cast %17 : vector<8xf32> to vector<8x1xf32>
    %cst_7 = arith.constant 3.125000e-03 : f32
    %19 = vector.broadcast %cst_7 : f32 to vector<8x1xf32>
    %20 = arith.mulf %19, %10 : vector<8x1xf32>
    %21 = arith.subf %8, %20 : vector<8x1xf32>
    %cst_8 = arith.constant 0.899999976 : f32
    %22 = vector.broadcast %cst_8 : f32 to vector<8x1xf32>
    %23 = arith.mulf %22, %18 : vector<8x1xf32>
    %24 = arith.subf %21, %23 : vector<8x1xf32>
    %25 = vector.shape_cast %24 : vector<8x1xf32> to vector<1x8x1xf32>
    %cst_9 = arith.constant dense<0.000000e+00> : vector<1xf32>
    %26 = vector.multi_reduction <add>, %25, %cst_9 [1, 2] : vector<1x8x1xf32> to vector<1xf32>
    %27 = vector.shape_cast %26 : vector<1xf32> to vector<1x1x1xf32>
    %28 = vector.extract %27[0, 0, 0] : f32 from vector<1x1x1xf32>
    %29 = vector.broadcast %28 : f32 to vector<1x8x128xf32>
    %c0_10 = arith.constant 0 : index
    %c0_11 = arith.constant 0 : index
    %c0_12 = arith.constant 0 : index
    %30 = vector.load %arg3[%c0_10, %c0_11, %c0_12] : memref<1x8x128xf32, #tpu.memory_space<vmem>>, vector<1x8x128xf32>
    tpu.vector_store %arg3[%c0_10, %c0_11, %c0_12], %29 {strides = array<i32>} : memref<1x8x128xf32, #tpu.memory_space<vmem>>, vector<1x8x128xf32>,
    return
  }
  func.func @transform_0(%arg0: i32) -> (i32, i32) {
    %c0_i32 = arith.constant 0 : i32
    %c0_i32_0 = arith.constant 0 : i32
    return %arg0, %c0_i32 : i32, i32
  }
  func.func @transform_1(%arg0: i32) -> (i32, i32) {
    %c0_i32 = arith.constant 0 : i32
    %c0_i32_0 = arith.constant 0 : i32
    return %arg0, %c0_i32 : i32, i32
  }
  func.func @transform_2(%arg0: i32) -> (i32, i32, i32) {
    %c0_i32 = arith.constant 0 : i32
    %c0_i32_0 = arith.constant 0 : i32
    %c0_i32_1 = arith.constant 0 : i32
    return %arg0, %c0_i32, %c0_i32_0 : i32, i32, i32
  }
}

</mosaic_0001>

<llo_original>
// kernel: tpu_custom_call.1
$region0: #{tpu_custom_call.1}
  #allocation0 [shape = 'u32[]', space=smem, size = 0x4, offset = 0x4, fixed_abs, tag = 'smem constant byte address 0x4 - core index']
  #allocation1 [shape = 'u32[144,128]{1,0:T(1,128)}', space=vmem, size = 0x12000, scoped, tag = 'internal scratch']
  %s0 = inlined_call_operand.vmem [shape: f32[16,32], index: 0, kind: input, shape index: {}]
  %s1 = inlined_call_operand.vmem [shape: s32[16,1], index: 1, kind: input, shape index: {}]
  %s2 = inlined_call_operand.hbm [shape: f32[2,8,128], index: 2, kind: output, shape index: {}]
  %s3 = sld [smem:[#allocation0]]
  $region41: #{tpu_custom_call.1} parent=0
    _
  %s5 = ssub.s32 1, %s3
  %s6 = scalar_select 0, %s5, %s3
  $region1: #{tpu_custom_call.1} parent=0
    #allocation2 [shape = 'u8[8192]{0}', space=vmem, size = 0x2000, scoped, tag = 'output window, operand 0']
    #allocation3 [shape = 's32[2]{0}', space=sflag, size = 0x8, scoped, tag = 'scoped memory for tpu_custom_call.1']
    %7 = vsyncpa [#allocation3], 0
    %s8 = scalar_lea.sflag [#allocation3], 1
    %9 = vsyncpa %s8, 0
    loop: start=0, step=1, limit=4
    $region2: #{tpu_custom_call.1} parent=1 // loop_pre_header
      _
    $region3: #{tpu_custom_call.1} parent=1 // loop_header
      %s11 = sphi 0, %s15
      %p12 = scmp.ge.s32.totalorder %s11, 4
      %s21 = sphi 0, %s23
      %s24 = sphi 0, %s21
      %s25 = sphi 0, %s24
      %s41 = sphi 0, %s25
      %s47 = sphi 0, %s49
      %s50 = sphi 0, %s47
      %s51 = sphi 0, %s50
      %s67 = sphi 0, %s51
      %s73 = sphi 0, %s75
      %s76 = sphi 0, %s73
      %s77 = sphi 0, %s76
      %s93 = sphi 0, %s77
    $region4: #{tpu_custom_call.1} parent=1 // loop_header_branch
      %14 = sbr.rel (%p12) target = $region8
    $region5: #{tpu_custom_call.1} parent=1 // loop_body
      %s16 = ssub.s32 %s11, 1
      %s17 = ssub.s32 %s11, 2
      %s18 = sadd.s32 %s11, 1
      %s19 = ssub.s32 %s11, %s18
      %p20 = scmp.eq.s32.totalorder %s19, 0
      %s22 = sadd.s32 %s21, 1
      %s23 = scalar_select %p20, %s21, %s22
      %p26 = pneg %p20
      %p27 = scmp.eq.s32.totalorder %s11, 1
      %p28 = por %p26, %p27
      %p29 = scmp.ne.s32.totalorder %s21, %s24
      %p30 = scmp.eq.s32.totalorder %s11, 0
      %p31 = por %p29, %p30
      %p32 = scmp.ne.s32.totalorder %s21, %s24
      %p33 = scmp.eq.s32.totalorder %s16, 1
      %p34 = por %p32, %p33
      %p35 = scmp.ne.s32.totalorder %s24, %s25
      %p36 = scmp.eq.s32.totalorder %s16, 0
      %p37 = por %p35, %p36
      %p38 = scmp.ne.s32.totalorder %s24, %s25
      %p39 = scmp.eq.s32.totalorder %s17, 1
      %p40 = por %p38, %p39
      %p42 = scmp.ne.s32.totalorder %s25, %s41
      %p43 = scmp.eq.s32.totalorder %s17, 0
      %p44 = por %p42, %p43
      %s45 = ssub.s32 %s11, %s18
      %p46 = scmp.eq.s32.totalorder %s45, 0
      %s48 = sadd.s32 %s47, 1
      %s49 = scalar_select %p46, %s47, %s48
      %p52 = pneg %p46
      %p53 = scmp.eq.s32.totalorder %s11, 1
      %p54 = por %p52, %p53
      %p55 = scmp.ne.s32.totalorder %s47, %s50
      %p56 = scmp.eq.s32.totalorder %s11, 0
      %p57 = por %p55, %p56
      %p58 = scmp.ne.s32.totalorder %s47, %s50
      %p59 = scmp.eq.s32.totalorder %s16, 1
      %p60 = por %p58, %p59
      %p61 = scmp.ne.s32.totalorder %s50, %s51
      %p62 = scmp.eq.s32.totalorder %s16, 0
      %p63 = por %p61, %p62
      %p64 = scmp.ne.s32.totalorder %s50, %s51
      %p65 = scmp.eq.s32.totalorder %s17, 1
      %p66 = por %p64, %p65
      %p68 = scmp.ne.s32.totalorder %s51, %s67
      %p69 = scmp.eq.s32.totalorder %s17, 0
      %p70 = por %p68, %p69
      %s71 = ssub.s32 %s11, %s18
      %p72 = scmp.eq.s32.totalorder %s71, 0
      %s74 = sadd.s32 %s73, 1
      %s75 = scalar_select %p72, %s73, %s74
      %p78 = pneg %p72
      %p79 = scmp.eq.s32.totalorder %s11, 1
      %p80 = por %p78, %p79
      %p81 = scmp.ne.s32.totalorder %s73, %s76
      %p82 = scmp.eq.s32.totalorder %s11, 0
      %p83 = por %p81, %p82
      %p84 = scmp.ne.s32.totalorder %s73, %s76
      %p85 = scmp.eq.s32.totalorder %s16, 1
      %p86 = por %p84, %p85
      %p87 = scmp.ne.s32.totalorder %s76, %s77
      %p88 = scmp.eq.s32.totalorder %s16, 0
      %p89 = por %p87, %p88
      %p90 = scmp.ne.s32.totalorder %s76, %s77
      %p91 = scmp.eq.s32.totalorder %s17, 1
      %p92 = por %p90, %p91
      %p94 = scmp.ne.s32.totalorder %s77, %s93
      %p95 = scmp.eq.s32.totalorder %s17, 0
      %p96 = por %p94, %p95
      %p97 = scmp.le.s32.totalorder 1, %s11
      %p98 = scmp.lt.s32.totalorder %s11, 3
      %p99 = pnand %p97, %p98
      %p100 = pneg %p99
      // Predicated region
      $region9: #{tpu_custom_call.1} parent=5 // pred_check
        _
      $region10: #{tpu_custom_call.1} parent=5 // pred_check_branch
        %102 = sbr.rel (%p99) target = $region12
      $region11: #{tpu_custom_call.1} parent=5 // pred_region
        %s103 = ssub.s32 %s11, 1
      $region12: #{tpu_custom_call.1} parent=5 // pred_fallthru
        _
      %p104 = scmp.lt.s32.totalorder %s11, 2
      // Predicated region
      $region13: #{tpu_custom_call.1} parent=5 // pred_check
        %p105 = pneg %p104
      $region14: #{tpu_custom_call.1} parent=5 // pred_check_branch
        %107 = sbr.rel (%p105) target = $region16
      $region15: #{tpu_custom_call.1} parent=5 // pred_region
        // Predicated region
        $region17: #{tpu_custom_call.1} parent=15 // pred_check
          %p108 = pneg %p31
        $region18: #{tpu_custom_call.1} parent=15 // pred_check_branch
          %110 = sbr.rel (%p108) target = $region20
        $region19: #{tpu_custom_call.1} parent=15 // pred_region
          %p111 = scmp.lt.s32.totalorder %s11, 1
          %s112 = scalar_select %p111, %s11, 1
          %s113 = smul.addr %s112, 8
          %s114 = scalar_lea.vmem %s0, %s113
        $region20: #{tpu_custom_call.1} parent=15 // pred_fallthru
          _
        // Predicated region
        $region21: #{tpu_custom_call.1} parent=15 // pred_check
          %p115 = pneg %p57
        $region22: #{tpu_custom_call.1} parent=15 // pred_check_branch
          %117 = sbr.rel (%p115) target = $region24
        $region23: #{tpu_custom_call.1} parent=15 // pred_region
          %p118 = scmp.lt.s32.totalorder %s11, 1
          %s119 = scalar_select %p118, %s11, 1
          %s120 = smul.addr %s119, 8
          %s121 = scalar_lea.vmem %s1, %s120
        $region24: #{tpu_custom_call.1} parent=15 // pred_fallthru
          _
      $region16: #{tpu_custom_call.1} parent=5 // pred_fallthru
        _
      %p122 = scmp.le.s32.totalorder 1, %s11
      %p123 = scmp.lt.s32.totalorder %s11, 3
      %p124 = pnand %p122, %p123
      %p125 = pneg %p124
      // Predicated region
      $region25: #{tpu_custom_call.1} parent=5 // pred_check
        _
      $region26: #{tpu_custom_call.1} parent=5 // pred_check_branch
        %127 = sbr.rel (%p124) target = $region28
      $region27: #{tpu_custom_call.1} parent=5 // pred_region
        %s128 = ssub.s32 %s11, 1
        %p129 = scmp.lt.s32.totalorder %s16, 1
        %s130 = scalar_select %p129, %s16, 1
        %s131 = smul.addr %s130, 8
        %s132 = scalar_lea.vmem %s0, %s131
        %p133 = pneg %p37
        %p134 = pneg %p34
        %p135 = scmp.lt.s32.totalorder %s16, 1
        %s136 = scalar_select %p135, %s16, 1
        %s137 = smul.addr %s136, 8
        %s138 = scalar_lea.vmem %s1, %s137
        %p139 = pneg %p63
        %p140 = pneg %p60
        %p141 = pneg %p89
        %p142 = pneg %p86
        %s143 = sand.u32 %s76, 1
        %s144 = scalar_lea.sflag [#allocation3], %s143
        %s145 = sand.u32 %s76, 1
        %s146 = smul.addr %s145, 8
        %s147 = scalar_lea.vmem [#allocation2], %s146
        %p148 = scmp.lt.s32.totalorder %s16, 1
        %s149 = scalar_select %p148, %s16, 1
        %s150 = smul.addr %s149, 8
        %s151 = scalar_lea.vmem %s0, %s150
        %p152 = scmp.lt.s32.totalorder %s16, 1
        %s153 = scalar_select %p152, %s16, 1
        %s154 = smul.addr %s153, 8
        %s155 = scalar_lea.vmem %s1, %s154
        %v156 = vld [vmem:[%s151] sm:$0xff]
        %vm157 = vcmask 261120
        %v158 = vsel %vm157, %v156, -inf
        %159 = vmax.xlane.f32.xlu0 %v158
        %v160 = vpop.xlane.xlu0 %159
        %v161 = vsub.f32 %v156, %v160
        %v162 = vmul.f32 %v161, 1.442695
        %v163 = vpow.pop %v162
        %v164 = vsel %vm157, %v163, 0.0
        %165 = vadd.xlane.f32.xlu0 %v164
        %v166 = vpop.xlane.xlu0 %165
        %v167 = vlog2.pop %v166
        %v168 = vmul.f32 %v167, 0.6931472
        %v169 = vsel %vm157, %v161, 0.0
        %170 = vadd.xlane.f32.xlu0 %v169
        %v171 = vpop.xlane.xlu0 %170
        %v172 = vld [vmem:[%s155] sm:$0xff]
        %v173 = vlaneseq
        %v174 = vand.u32 %v173, 127
        %175 = vset.pattern.permute.xlu0 0
        %176 = vperm.xlu0 %175, %v172
        %v177 = vpop.permute.xlu0 %176
        %vm178 = vcmp.eq.s32.totalorder %v174, %v177
        %v179 = vsel %vm178, %v161, 0.0
        %v180 = vsel %vm157, %v179, 0.0
        %181 = vadd.xlane.f32.xlu0 %v180
        %v182 = vpop.xlane.xlu0 %181
        %v183 = vmul.f32 %v171, 0.003125
        %v184 = vsub.f32 %v168, %v183
        %v185 = vmul.f32 %v182, 0.9
        %v186 = vsub.f32 %v184, %v185
        %vm187 = vcmask 7168
        %v188 = vsel %vm187, %v186, 0.0
        %189 = vadd.xlane.f32.xlu0 %v188
        %v190 = vpop.xlane.xlu0 %189
        %v191 = vrot.slane %v190, 4
        %v192 = vadd.f32 %v190, %v191
        %v193 = vrot.slane %v192, 2
        %v194 = vadd.f32 %v192, %v193
        %v195 = vrot.slane %v194, 1
        %v196 = vadd.f32 %v194, %v195
        %s197 = vtos %v196
        %v198 = vstv %s197
        %199 = vst [vmem:[%s147] sm:$0xff] %v198
        %s200 = sand.u32 %s76, 1
        %s201 = scalar_lea.sflag [#allocation3], %s200
        %s202 = sand.u32 %s76, 1
        %s203 = smul.addr %s202, 8
        %s204 = scalar_lea.vmem [#allocation2], %s203
        // Predicated region
        $region29: #{tpu_custom_call.1} parent=27 // pred_check
          %p205 = pneg %p86
        $region30: #{tpu_custom_call.1} parent=27 // pred_check_branch
          %207 = sbr.rel (%p205) target = $region32
        $region31: #{tpu_custom_call.1} parent=27 // pred_region
          %s209 = ssub.s32 128, 128
          %210 = vsyncadd %s201, %s209
          %s211 = smul.addr %s16, 128
          %s212 = scalar_lea.hbm %s2, %s211
          %s214 = sshll.u32 %s204, 4
          %s215 = int_to_ptr.vmem [resolvable:$true] %s214
          %217 = dma.vmem_to_hbm [thread:$0]  %s215, 128, %s212, %s201
        $region32: #{tpu_custom_call.1} parent=27 // pred_fallthru
          _
      $region28: #{tpu_custom_call.1} parent=5 // pred_fallthru
        _
      %p218 = scmp.le.s32.totalorder 2, %s11
      // Predicated region
      $region33: #{tpu_custom_call.1} parent=5 // pred_check
        %p219 = pneg %p218
      $region34: #{tpu_custom_call.1} parent=5 // pred_check_branch
        %221 = sbr.rel (%p219) target = $region36
      $region35: #{tpu_custom_call.1} parent=5 // pred_region
        %s222 = ssub.s32 %s11, 2
        // Predicated region
        $region37: #{tpu_custom_call.1} parent=35 // pred_check
          %p223 = pneg %p92
        $region38: #{tpu_custom_call.1} parent=35 // pred_check_branch
          %225 = sbr.rel (%p223) target = $region40
        $region39: #{tpu_custom_call.1} parent=35 // pred_region
          %s226 = sand.u32 %s77, 1
          %s227 = scalar_lea.sflag [#allocation3], %s226
          %s228 = sand.u32 %s77, 1
          %s229 = smul.addr %s228, 8
          %s230 = scalar_lea.vmem [#allocation2], %s229
          %231 = dma.done %s227, 128
        $region40: #{tpu_custom_call.1} parent=35 // pred_fallthru
          _
      $region36: #{tpu_custom_call.1} parent=5 // pred_fallthru
        _
    $region6: #{tpu_custom_call.1} parent=1 // loop_footer
      %s15 = sadd.s32 1, %s11
    $region7: #{tpu_custom_call.1} parent=1 // loop_footer_branch
      %10 = sbr.rel target = $region3
    $region8: #{tpu_custom_call.1} parent=1 // loop_exit
      _
    %232 = vsyncpa [#allocation3], 1
    %s233 = scalar_lea.sflag [#allocation3], 1
    %234 = vsyncpa %s233, 1

</llo_original>
